<compile_context>
chip_gen: v5e
topology: v5e:2x2
jax: 0.10.0
libtpu: 0.0.40
codegen_flags: <defaults>
</compile_context>

<pallas_src>
import re

import jax
import jax.numpy as jnp
from jax.experimental import pallas as pl
from jax.experimental.pallas import tpu as pltpu

LANE = 128


def _tpu_generation() -> int:
    """Best-effort TPU generation number (5, 6, 7, ...). 0 if unknown."""
    try:
        kind = jax.devices()[0].device_kind
    except Exception:
        return 0
    m = re.search(r"(\d+)", str(kind))
    return int(m.group(1)) if m else 0


def _make_swish_kernel(compute_dtype):
    def kernel(x_ref, o_ref):
        x = x_ref[...].astype(compute_dtype)
        # swish(x) = x * sigmoid(x) = 0.5 * x * (tanh(0.5 * x) + 1)
        # -> exactly one EUP transcendental per element.
        y = (x * 0.5) * (jnp.tanh(x * 0.5) + 1.0)
        # Note: for integer / fp8 storage dtypes this cast truncates (expected).
        o_ref[...] = y.astype(o_ref.dtype)

    return kernel


def _pick_cols(n: int, sublane: int) -> int:
    """Widest lane-dense divisor of n that still leaves rows >= sublane."""
    candidates = (32768, 16384, 8192, 4096, 2048, 1024, 512, 256, 128)
    for cand in candidates:
        if n % cand == 0 and n // cand >= sublane:
            return cand
    for cand in candidates:
        if n % cand == 0:
            return cand
    return LANE  # unreachable when n % 128 == 0


def _swish_2d(x2d, *, block_bytes, vmem_limit, compute_dtype):
    """Run the swish kernel over a lane-dense 2D slab (rows, cols)."""
    rows, cols = x2d.shape
    dtype = x2d.dtype
    itemsize = jnp.dtype(dtype).itemsize
    sublane = {4: 8, 2: 16, 1: 32}.get(itemsize, 8)

    # Row tile sized to ~block_bytes, sublane-aligned.
    tile = (block_bytes // (cols * itemsize)) // sublane * sublane
    tile = max(sublane, tile)

    total_bytes = rows * cols * itemsize
    if tile >= rows:
        if total_bytes > (1 << 20) and rows > sublane:
            # Keep at least 2 grid steps so in/out DMAs overlap with compute.
            half_rows = pl.cdiv(rows, 2)
            tile = max(sublane, pl.cdiv(half_rows, sublane) * sublane)
            tile = min(tile, rows)
        else:
            # Whole array in one block; full-dim block shape is always legal.
            tile = rows

    grid = (pl.cdiv(rows, tile),)

    compiler_kwargs = dict(dimension_semantics=("parallel",))
    if vmem_limit is not None:
        compiler_kwargs["vmem_limit_bytes"] = vmem_limit

    return pl.pallas_call(
        _make_swish_kernel(compute_dtype),
        out_shape=jax.ShapeDtypeStruct((rows, cols), dtype),
        grid_spec=pltpu.PrefetchScalarGridSpec(
            num_scalar_prefetch=0,
            grid=grid,
            in_specs=[pl.BlockSpec((tile, cols), lambda i: (i, 0))],
            out_specs=pl.BlockSpec((tile, cols), lambda i: (i, 0)),
        ),
        compiler_params=pltpu.CompilerParams(**compiler_kwargs),
    )(x2d)


def swish_pallas(x: jax.Array) -> jax.Array:
    """Elementwise Swish/SiLU. Accepts any shape; preserves shape & dtype.

    # TODO(synk): `inplace=True` (x.mul_) has no meaning in functional JAX; a
    # new array is returned either way (same out-of-place forward semantics).
    """
    orig_shape = x.shape
    dtype = x.dtype
    n = x.size
    if n == 0:
        return x

    gen = _tpu_generation()
    # Generation-aware streaming block target (bytes per input block).
    if gen >= 7:
        # v7x: 3.2 TB/s HBM, 64 MiB VMEM. 6 MiB blocks -> 4x6=24 MiB buffers;
        # raise scoped VMEM for headroom (still << 64 MiB physical).
        block_bytes, vmem_limit = 6 * 1024 * 1024, 48 * 1024 * 1024
    elif gen == 6:
        # v6e: 4 MiB blocks -> 16 MiB buffers, within the 32 MiB scoped default.
        block_bytes, vmem_limit = 4 * 1024 * 1024, None
    else:
        # v5e / unknown: 16 MiB scoped default; 2 MiB blocks -> 8 MiB buffers.
        block_bytes, vmem_limit = 2 * 1024 * 1024, None

    # bf16 compute only on v6e+ (native bf16 VPU/EUP); f32 everywhere else.
    compute_dtype = jnp.bfloat16 if (dtype == jnp.bfloat16 and gen >= 6) else jnp.float32

    itemsize = jnp.dtype(dtype).itemsize
    sublane = {4: 8, 2: 16, 1: 32}.get(itemsize, 8)

    if n % LANE == 0:
        # Free reshape (no data movement) to a lane-dense slab.
        cols = _pick_cols(n, sublane)
        out2d = _swish_2d(
            x.reshape(n // cols, cols),
            block_bytes=block_bytes, vmem_limit=vmem_limit, compute_dtype=compute_dtype,
        )
        return out2d.reshape(orig_shape)

    # ---- size not a multiple of 128 lanes (rare) --------------------------
    flat = x.reshape(-1)
    n_main = (n // LANE) * LANE

    if n_main == 0:
        # Tiny array (< 128 elements): single full-extent block, no copies.
        out = _swish_2d(
            flat.reshape(1, n),
            block_bytes=block_bytes, vmem_limit=vmem_limit, compute_dtype=compute_dtype,
        )
        return out.reshape(orig_shape)

    # Kernel on the 128-aligned prefix; tiny (<128 elem) tail in plain jnp.
    main = flat[:n_main]
    tail = flat[n_main:]
    cols = _pick_cols(n_main, sublane)
    out_main = _swish_2d(
        main.reshape(n_main // cols, cols),
        block_bytes=block_bytes, vmem_limit=vmem_limit, compute_dtype=compute_dtype,
    )
    tf = tail.astype(jnp.float32)
    out_tail = (tf * jax.nn.sigmoid(tf)).astype(dtype)
    return jnp.concatenate([out_main.reshape(-1), out_tail]).reshape(orig_shape)


if __name__ == "__main__":
    key = jax.random.PRNGKey(0)

    # NCHW input consistent with the conv-style module: batch=2, channels=4, 16x16.
    x = jax.random.normal(key, (2, 4, 16, 16), dtype=jnp.float32)
    y = jax.block_until_ready(swish_pallas(x))
    y_ref = x * jax.nn.sigmoid(x)
    assert y.shape == x.shape and y.dtype == x.dtype
    assert jnp.max(jnp.abs(y - y_ref)) < 1e-5

    # Awkward size (not a multiple of 128) exercises the tiny full-extent path.
    x2 = jax.random.normal(jax.random.PRNGKey(1), (3, 5, 7), dtype=jnp.float32)
    y2 = jax.block_until_ready(swish_pallas(x2))
    y2_ref = x2 * jax.nn.sigmoid(x2)
    assert y2.shape == x2.shape and y2.dtype == x2.dtype
    assert jnp.max(jnp.abs(y2 - y2_ref)) < 1e-5

    # Larger awkward size (>128 but not a multiple of 128): prefix + tail path.
    x3 = jax.random.normal(jax.random.PRNGKey(3), (5, 77), dtype=jnp.float32)
    y3 = jax.block_until_ready(swish_pallas(x3))
    y3_ref = x3 * jax.nn.sigmoid(x3)
    assert y3.shape == x3.shape and y3.dtype == x3.dtype
    assert jnp.max(jnp.abs(y3 - y3_ref)) < 1e-5

    # bf16 storage path (bf16 compute on v6e+/f32 elsewhere).
    xb = jax.random.normal(jax.random.PRNGKey(2), (2, 4, 16, 16), dtype=jnp.bfloat16)
    yb = jax.block_until_ready(swish_pallas(xb))
    xbf = xb.astype(jnp.float32)
    yb_ref = xbf * jax.nn.sigmoid(xbf)
    assert yb.shape == xb.shape and yb.dtype == xb.dtype
    assert jnp.max(jnp.abs(yb.astype(jnp.float32) - yb_ref)) < 1.5e-1

    print("KERNEL_OK")
</pallas_src>

<mosaic_0001>
module attributes {stable_mosaic.version = 11 : i64} {
  func.func @kernel(%arg0: i32, %arg1: memref<8x256xf32, #tpu.memory_space<vmem>>, %arg2: memref<8x256xf32, #tpu.memory_space<vmem>>) attributes {dimension_semantics = [#tpu.dimension_semantics<parallel>], iteration_bounds = array<i64: 1>, scalar_prefetch = 0 : i64, scratch_operands = 0 : i64, tpu.core_type = #tpu.core_type<tc>, window_params = [{transform_indices = @transform_0, window_bounds = array<i64: 8, 256>}, {transform_indices = @transform_1, window_bounds = array<i64: 8, 256>}]} {
    %c0 = arith.constant 0 : index
    %c0_0 = arith.constant 0 : index
    %0 = vector.load %arg1[%c0, %c0_0] : memref<8x256xf32, #tpu.memory_space<vmem>>, vector<8x256xf32>
    %cst = arith.constant 5.000000e-01 : f32
    %1 = vector.broadcast %cst : f32 to vector<8x256xf32>
    %2 = arith.mulf %0, %1 : vector<8x256xf32>
    %cst_1 = arith.constant 5.000000e-01 : f32
    %3 = vector.broadcast %cst_1 : f32 to vector<8x256xf32>
    %4 = arith.mulf %0, %3 : vector<8x256xf32>
    %5 = math.tanh %4 : vector<8x256xf32>
    %cst_2 = arith.constant 1.000000e+00 : f32
    %6 = vector.broadcast %cst_2 : f32 to vector<8x256xf32>
    %7 = arith.addf %5, %6 : vector<8x256xf32>
    %8 = arith.mulf %2, %7 : vector<8x256xf32>
    %c0_3 = arith.constant 0 : index
    %c0_4 = arith.constant 0 : index
    %9 = vector.load %arg2[%c0_3, %c0_4] : memref<8x256xf32, #tpu.memory_space<vmem>>, vector<8x256xf32>
    tpu.vector_store %arg2[%c0_3, %c0_4], %8 {strides = array<i32>} : memref<8x256xf32, #tpu.memory_space<vmem>>, vector<8x256xf32>,
    return
  }
  func.func @transform_0(%arg0: i32) -> (i32, i32) {
    %c0_i32 = arith.constant 0 : i32
    %c0_i32_0 = arith.constant 0 : i32
    return %arg0, %c0_i32 : i32, i32
  }
  func.func @transform_1(%arg0: i32) -> (i32, i32) {
    %c0_i32 = arith.constant 0 : i32
    %c0_i32_0 = arith.constant 0 : i32
    return %arg0, %c0_i32 : i32, i32
  }
}

</mosaic_0001>

<llo_original>
// kernel: tpu_custom_call.1
$region0: #{tpu_custom_call.1}
  #allocation0 [shape = 'u32[]', space=smem, size = 0x4, offset = 0x4, fixed_abs, tag = 'smem constant byte address 0x4 - core index']
  #allocation1 [shape = 'u32[72,128]{1,0:T(1,128)}', space=vmem, size = 0x9000, scoped, tag = 'internal scratch']
  %s0 = inlined_call_operand.hbm [shape: f32[8,256], index: 0, kind: input, shape index: {}]
  %s1 = inlined_call_operand.hbm [shape: f32[8,256], index: 1, kind: output, shape index: {}]
  %s2 = sld [smem:[#allocation0]]
  $region18: #{tpu_custom_call.1} parent=0
    _
  %s4 = ssub.s32 1, %s2
  %s5 = scalar_select 0, %s4, %s2
  $region1: #{tpu_custom_call.1} parent=0
    #allocation2 [shape = 'u8[8192]{0}', space=vmem, size = 0x2000, scoped, tag = 'input window, operand 0, single buffered']
    #allocation3 [shape = 's32[1]{0}', space=sflag, size = 0x4, scoped, tag = 'scoped memory for tpu_custom_call.1']
    #allocation4 [shape = 's32[1]{0}', space=sflag, size = 0x4, scoped, tag = 'scoped memory for tpu_custom_call.1']
    #allocation5 [shape = 'u8[8192]{0}', space=vmem, size = 0x2000, scoped, tag = 'output window, operand 0, single buffered']
    %6 = vsyncpa [#allocation3], 0
    %7 = vsyncpa [#allocation4], 0
    // Predicated region
    $region2: #{tpu_custom_call.1} parent=1 // pred_check
      _
    $region3: #{tpu_custom_call.1} parent=1 // pred_check_branch
      %9 = sbr.rel (0) target = $region5
    $region4: #{tpu_custom_call.1} parent=1 // pred_region
      %11 = vsyncadd [#allocation3], 0
      %s13 = sshll.u32 %s0, 4
      %s14 = int_to_ptr.hbm [resolvable:$true] %s13
      %s15 = sshll.u32 [#allocation2], 4
      %s16 = int_to_ptr.vmem [resolvable:$true] %s15
      %18 = dma.hbm_to_vmem [thread:$0]  %s14, 256, %s16, [#allocation3]
    $region5: #{tpu_custom_call.1} parent=1 // pred_fallthru
      _
    // Predicated region
    $region6: #{tpu_custom_call.1} parent=1 // pred_check
      _
    $region7: #{tpu_custom_call.1} parent=1 // pred_check_branch
      %20 = sbr.rel (0) target = $region9
    $region8: #{tpu_custom_call.1} parent=1 // pred_region
      %22 = dma.done [#allocation3], 256
    $region9: #{tpu_custom_call.1} parent=1 // pred_fallthru
      _
    %v23 = vld [vmem:[#allocation2] sm:$0xff]
    %v24 = vld [vmem:[#allocation2 + $0x8] sm:$0xff]
    %v25 = vmul.f32 %v23, 0.5
    %v26 = vmul.f32 %v24, 0.5
    %v27 = vtanh.pop %v25
    %v28 = vtanh.pop %v26
    %v29 = vadd.f32 %v27, 1.0
    %v30 = vadd.f32 %v28, 1.0
    %v31 = vmul.f32 %v25, %v29
    %v32 = vmul.f32 %v26, %v30
    %33 = vst [vmem:[#allocation5] sm:$0xff] %v31
    %34 = vst [vmem:[#allocation5 + $0x8] sm:$0xff] %v32
    // Predicated region
    $region10: #{tpu_custom_call.1} parent=1 // pred_check
      _
    $region11: #{tpu_custom_call.1} parent=1 // pred_check_branch
      %36 = sbr.rel (0) target = $region13
    $region12: #{tpu_custom_call.1} parent=1 // pred_region
      %38 = vsyncadd [#allocation4], 0
      %s40 = sshll.u32 [#allocation5], 4
      %s41 = int_to_ptr.vmem [resolvable:$true] %s40
      %s42 = sshll.u32 %s1, 4
      %s43 = int_to_ptr.hbm [resolvable:$true] %s42
      %45 = dma.vmem_to_hbm [thread:$0]  %s41, 256, %s43, [#allocation4]
    $region13: #{tpu_custom_call.1} parent=1 // pred_fallthru
      _
    // Predicated region
    $region14: #{tpu_custom_call.1} parent=1 // pred_check
      _
    $region15: #{tpu_custom_call.1} parent=1 // pred_check_branch
      %47 = sbr.rel (0) target = $region17
    $region16: #{tpu_custom_call.1} parent=1 // pred_region
      %49 = dma.done [#allocation4], 256
    $region17: #{tpu_custom_call.1} parent=1 // pred_fallthru
      _
    %50 = vsyncpa [#allocation3], 1
    %51 = vsyncpa [#allocation4], 1

</llo_original>
